<compile_context>
chip_gen: v5e
topology: v5e:2x2
jax: 0.10.0
libtpu: 0.0.40
codegen_flags: <defaults>
</compile_context>

<pallas_src>
import functools

import jax
import jax.numpy as jnp
import numpy as np
from jax.experimental import pallas as pl
from jax.experimental.pallas import tpu as pltpu


def lsh_kernel(x_ref, w_ref, b_ref, out_ref, *, num_buckets):
    # x_ref:   (tile_rows, k * D)            activations, k tokens per row
    # w_ref:   (k * D, k * H)                block-diagonal packed projections.T
    # b_ref:   (1, k * H)        float32     biases tiled k times
    # out_ref: (tile_rows, k * H) int32      k tokens' hashes per row
    h = jnp.dot(x_ref[...], w_ref[...], preferred_element_type=jnp.float32)
    h = h + b_ref[...]
    # Exact floor division (matches torch.floor_divide for any num_buckets).
    out_ref[...] = jnp.floor(h / num_buckets).astype(jnp.int32)


def _is_v5e():
    try:
        kind = jax.devices()[0].device_kind.lower()
        return ("v5 lite" in kind) or ("v5e" in kind) or ("v5litepod" in kind)
    except Exception:
        return False


def lsh_forward(x, projections, biases, num_buckets):
    """Pallas LSH forward. x: (..., emb_dim) -> (..., num_hashes) int32."""
    *lead, D = x.shape
    H, D2 = projections.shape
    assert D == D2, "emb_dim mismatch"
    M = int(np.prod(lead)) if lead else 1

    # Keep bf16 activations as-is (halves the binding HBM read traffic).
    compute_dtype = jnp.bfloat16 if x.dtype == jnp.bfloat16 else jnp.float32
    x_itemsize = jnp.dtype(compute_dtype).itemsize

    # ---- per-generation VMEM / tile budgeting -------------------------------
    try:
        vmem_cap = int(pltpu.get_tpu_info().vmem_capacity_bytes)
    except Exception:
        vmem_cap = 64 << 20                      # conservative (v7x per-TC VMEM)
    small_vmem = vmem_cap <= (64 << 20)          # v7x
    w_cap_bytes = (8 << 20) if small_vmem else (16 << 20)   # resident kron weight cap
    vmem_limit = (48 << 20) if small_vmem else (96 << 20)
    # v7x HBM (~3.2 TB/s) makes the fixed per-step overhead relatively larger,
    # so target bigger tiles there; 2-4 MiB already hits ~85-90% of roofline
    # on v5e/v6e.
    target_tile_bytes = (8 << 20) if small_vmem else (4 << 20)

    # ---- lane-pack factor k --------------------------------------------------
    k = max(1, 128 // H) if 0 < H <= 128 else 1
    # v5e: the kron trick multiplies MXU FLOPs by k; with f32 activations and
    # v5e's weak f32 MXU that can become co-binding, so keep k*H <= 32 there.
    if compute_dtype == jnp.float32 and _is_v5e():
        k = min(k, max(1, 32 // H))
    # Cap the resident kron weight against the per-generation budget (counted
    # twice: it stays default double-buffered).  Fall back to the largest k
    # that fits rather than straight to k=1 (keeps the lane-dense output).
    while k > 1 and 2 * (k * D) * (k * H) * x_itemsize > w_cap_bytes:
        k -= 1
    # Prefer a k that divides M so no padding copy is needed at all (only
    # search the upper half so lane density stays high).
    pad_rows = (-M) % k
    if pad_rows:
        for k2 in range(k, max(1, k // 2) - 1, -1):
            if M % k2 == 0:
                k, pad_rows = k2, 0
                break
        pad_rows = (-M) % k

    # ---- pack activations / weights (wrapper-side, layout only) -------------
    x2 = x.reshape(M, D).astype(compute_dtype)
    if pad_rows:
        # Small pad (< k rows), only when M is not a multiple of any good k.
        x2 = jnp.pad(x2, ((0, pad_rows), (0, 0)))
    Mp = M + pad_rows
    rows = Mp // k
    x_packed = x2.reshape(rows, k * D)                    # free row-major reshape

    proj_t = projections.astype(compute_dtype).T          # (D, H), transposed once
    if k > 1:
        # Block-diagonal packed weight: block (i, i) = projections.T
        w_packed = jnp.kron(jnp.eye(k, dtype=compute_dtype), proj_t)   # (kD, kH)
    else:
        w_packed = proj_t
    b_packed = jnp.tile(biases.reshape(1, H).astype(jnp.float32), (1, k))

    # ---- tile sizing ---------------------------------------------------------
    row_in_bytes = k * D * x_itemsize
    row_out_bytes = k * H * 4
    w_bytes = (k * D) * (k * H) * x_itemsize
    # x and out tiles are double-buffered; weight budgeted 2x (double-buffered),
    # plus ~2 MiB slack for bias / misc.
    budget = vmem_limit - 2 * w_bytes - (2 << 20)
    rows_by_vmem = max(8, budget // (2 * (row_in_bytes + row_out_bytes)))
    rows_by_target = max(8, target_tile_bytes // row_in_bytes)
    tile_rows = int(min(rows_by_target, rows_by_vmem))
    tile_rows = max(8, (tile_rows // 8) * 8)
    # Keep >= 2 grid steps when there is enough work so the "parallel" grid
    # axis can shard across v7x's two TensorCores.
    if rows > 16:
        tile_rows = min(tile_rows, ((pl.cdiv(rows, 2) + 7) // 8) * 8)
    if tile_rows >= rows:
        tile_rows = rows                        # single step: block == full extent
    grid = (pl.cdiv(rows, tile_rows),)

    flops = 2 * rows * (k * D) * (k * H)
    bytes_accessed = rows * (row_in_bytes + row_out_bytes) + w_bytes + k * H * 4
    cost = pl.CostEstimate(flops=flops, transcendentals=0,
                           bytes_accessed=bytes_accessed)

    kernel = functools.partial(lsh_kernel, num_buckets=num_buckets)

    out = pl.pallas_call(
        kernel,
        out_shape=jax.ShapeDtypeStruct((rows, k * H), jnp.int32),
        grid_spec=pltpu.PrefetchScalarGridSpec(
            num_scalar_prefetch=0,
            grid=grid,
            in_specs=[
                pl.BlockSpec((tile_rows, k * D), lambda i: (i, 0)),   # x tile
                pl.BlockSpec((k * D, k * H), lambda i: (0, 0)),       # weight (resident)
                pl.BlockSpec((1, k * H), lambda i: (0, 0)),           # bias (resident)
            ],
            out_specs=pl.BlockSpec((tile_rows, k * H), lambda i: (i, 0)),
        ),
        compiler_params=pltpu.CompilerParams(
            dimension_semantics=("parallel",),      # megacore-shardable on v7x
            vmem_limit_bytes=vmem_limit,
        ),
        cost_estimate=cost,
    )(x_packed, w_packed, b_packed)

    out = out.reshape(Mp, H)          # free: row-major reinterpretation
    if pad_rows:
        out = out[:M]
    return out.reshape(*lead, H)


def lsh_reference(x, projections, biases, num_buckets):
    h = jnp.matmul(x, projections.T, precision=jax.lax.Precision.HIGHEST) + biases
    return jnp.floor(h / num_buckets).astype(jnp.int32)


if __name__ == "__main__":
    # Small, deterministic config consistent with the module.
    batch, seq, emb_dim = 2, 8, 32
    num_hashes, num_buckets = 8, 16

    key = jax.random.PRNGKey(0)
    kx, kp, kb = jax.random.split(key, 3)

    x = jax.random.normal(kx, (batch, seq, emb_dim), dtype=jnp.float32)
    # Parameters initialized like torch.randn in __init__.
    projections = jax.random.normal(kp, (num_hashes, emb_dim), dtype=jnp.float32)
    biases = jax.random.normal(kb, (num_hashes,), dtype=jnp.float32)

    out = jax.block_until_ready(lsh_forward(x, projections, biases, num_buckets))
    ref = lsh_reference(x, projections, biases, num_buckets)
    np.testing.assert_array_equal(np.asarray(out), np.asarray(ref))
    assert out.shape == (batch, seq, num_hashes)
    assert out.dtype == jnp.int32

    # Multi-step grid with a non-divisible packed-row count: exercises the
    # masked partial last block (no padding, no trailing slice).
    x2 = jax.random.normal(jax.random.PRNGKey(1), (4, 80, emb_dim), dtype=jnp.float32)
    out2 = jax.block_until_ready(lsh_forward(x2, projections, biases, num_buckets))
    ref2 = lsh_reference(x2, projections, biases, num_buckets)
    np.testing.assert_array_equal(np.asarray(out2), np.asarray(ref2))
    assert out2.shape == (4, 80, num_hashes)

    # Token count not divisible by any good pack factor: exercises the small
    # pad-to-k path and the trailing un-pad slice.
    x3 = jax.random.normal(jax.random.PRNGKey(2), (3, 7, emb_dim), dtype=jnp.float32)
    out3 = jax.block_until_ready(lsh_forward(x3, projections, biases, num_buckets))
    ref3 = lsh_reference(x3, projections, biases, num_buckets)
    np.testing.assert_array_equal(np.asarray(out3), np.asarray(ref3))
    assert out3.shape == (3, 7, num_hashes)

    print("KERNEL_OK")
</pallas_src>

<mosaic_0001>
module attributes {stable_mosaic.version = 11 : i64} {
  func.func @lsh_kernel(%arg0: i32, %arg1: memref<1x512xf32, #tpu.memory_space<vmem>>, %arg2: memref<512x128xf32, #tpu.memory_space<vmem>>, %arg3: memref<1x128xf32, #tpu.memory_space<vmem>>, %arg4: memref<1x128xi32, #tpu.memory_space<vmem>>) attributes {dimension_semantics = [#tpu.dimension_semantics<parallel>], iteration_bounds = array<i64: 1>, scalar_prefetch = 0 : i64, scratch_operands = 0 : i64, tpu.core_type = #tpu.core_type<tc>, window_params = [{transform_indices = @transform_0, window_bounds = array<i64: 1, 512>}, {pipeline_mode = #tpu.pipeline_mode<synchronous>, transform_indices = @transform_1, window_bounds = array<i64: 512, 128>}, {pipeline_mode = #tpu.pipeline_mode<synchronous>, transform_indices = @transform_2, window_bounds = array<i64: 1, 128>}, {transform_indices = @transform_3, window_bounds = array<i64: 1, 128>}]} {
    %c0 = arith.constant 0 : index
    %c0_0 = arith.constant 0 : index
    %0 = vector.load %arg1[%c0, %c0_0] : memref<1x512xf32, #tpu.memory_space<vmem>>, vector<1x512xf32>
    %c0_1 = arith.constant 0 : index
    %c0_2 = arith.constant 0 : index
    %1 = vector.load %arg2[%c0_1, %c0_2] : memref<512x128xf32, #tpu.memory_space<vmem>>, vector<512x128xf32>
    %cst = arith.constant dense<0.000000e+00> : vector<1x128xf32>
    %2 = tpu.matmul %0, %1, %cst {dimension_numbers = #tpu.dot_dimension_numbers<[1], [0], [0], [1], [0, 0, 1, 1], [], []>} : vector<1x512xf32>, vector<512x128xf32>, vector<1x128xf32> -> vector<1x128xf32>
    %c0_3 = arith.constant 0 : index
    %c0_4 = arith.constant 0 : index
    %3 = vector.load %arg3[%c0_3, %c0_4] : memref<1x128xf32, #tpu.memory_space<vmem>>, vector<1x128xf32>
    %4 = arith.addf %2, %3 : vector<1x128xf32>
    %cst_5 = arith.constant 1.600000e+01 : f32
    %5 = vector.broadcast %cst_5 : f32 to vector<1x128xf32>
    %6 = arith.divf %4, %5 : vector<1x128xf32>
    %7 = math.floor %6 : vector<1x128xf32>
    %8 = arith.fptosi %7 : vector<1x128xf32> to vector<1x128xi32>
    %c0_6 = arith.constant 0 : index
    %c0_7 = arith.constant 0 : index
    %9 = vector.load %arg4[%c0_6, %c0_7] : memref<1x128xi32, #tpu.memory_space<vmem>>, vector<1x128xi32>
    tpu.vector_store %arg4[%c0_6, %c0_7], %8 {strides = array<i32>} : memref<1x128xi32, #tpu.memory_space<vmem>>, vector<1x128xi32>,
    return
  }
  func.func @transform_0(%arg0: i32) -> (i32, i32) {
    %c0_i32 = arith.constant 0 : i32
    %c0_i32_0 = arith.constant 0 : i32
    return %arg0, %c0_i32 : i32, i32
  }
  func.func @transform_1(%arg0: i32) -> (i32, i32) {
    %c0_i32 = arith.constant 0 : i32
    %c0_i32_0 = arith.constant 0 : i32
    %c0_i32_1 = arith.constant 0 : i32
    return %c0_i32, %c0_i32_0 : i32, i32
  }
  func.func @transform_2(%arg0: i32) -> (i32, i32) {
    %c0_i32 = arith.constant 0 : i32
    %c0_i32_0 = arith.constant 0 : i32
    %c0_i32_1 = arith.constant 0 : i32
    return %c0_i32, %c0_i32_0 : i32, i32
  }
  func.func @transform_3(%arg0: i32) -> (i32, i32) {
    %c0_i32 = arith.constant 0 : i32
    %c0_i32_0 = arith.constant 0 : i32
    return %arg0, %c0_i32 : i32, i32
  }
}

</mosaic_0001>

<llo_original>
// kernel: tpu_custom_call.1
$region0: #{tpu_custom_call.1}
  #allocation0 [shape = 'u32[]', space=smem, size = 0x4, offset = 0x4, fixed_abs, tag = 'smem constant byte address 0x4 - core index']
  #allocation1 [shape = 'u32[72,128]{1,0:T(1,128)}', space=vmem, size = 0x9000, scoped, tag = 'internal scratch']
  %s0 = inlined_call_operand.hbm [shape: f32[1,512], index: 0, kind: input, shape index: {}]
  %s1 = inlined_call_operand.hbm [shape: f32[512,128], index: 1, kind: input, shape index: {}]
  %s2 = inlined_call_operand.vmem [shape: f32[1,128], index: 2, kind: input, shape index: {}]
  %s3 = inlined_call_operand.hbm [shape: s32[1,128], index: 3, kind: output, shape index: {}]
  %s4 = sld [smem:[#allocation0]]
  $region30: #{tpu_custom_call.1} parent=0
    _
  %s6 = ssub.s32 1, %s4
  %s7 = scalar_select 0, %s6, %s4
  $region1: #{tpu_custom_call.1} parent=0
    #allocation2 [shape = 'u8[2048]{0}', space=vmem, size = 0x800, scoped, tag = 'input window, operand 0, single buffered']
    #allocation3 [shape = 's32[1]{0}', space=sflag, size = 0x4, scoped, tag = 'scoped memory for tpu_custom_call.1']
    #allocation4 [shape = 's32[1]{0}', space=sflag, size = 0x4, scoped, tag = 'scoped memory for tpu_custom_call.1']
    #allocation5 [shape = 'u8[262144]{0}', space=vmem, size = 0x40000, scoped, tag = 'input window, operand 1, single buffered']
    #allocation6 [shape = 's32[1]{0}', space=sflag, size = 0x4, scoped, tag = 'scoped memory for tpu_custom_call.1']
    #allocation7 [shape = 'u8[512]{0}', space=vmem, size = 0x400, scoped, tag = 'output window, operand 0, single buffered']
    %8 = vsyncpa [#allocation3], 0
    %9 = vsyncpa [#allocation6], 0
    %10 = vsyncpa [#allocation4], 0
    // Predicated region
    $region2: #{tpu_custom_call.1} parent=1 // pred_check
      _
    $region3: #{tpu_custom_call.1} parent=1 // pred_check_branch
      %12 = sbr.rel (0) target = $region5
    $region4: #{tpu_custom_call.1} parent=1 // pred_region
      %14 = vsyncadd [#allocation3], 0
      %s16 = sshll.u32 %s0, 4
      %s17 = int_to_ptr.hbm [resolvable:$true] %s16
      %s18 = sshll.u32 [#allocation2], 4
      %s19 = int_to_ptr.vmem [resolvable:$true] %s18
      %21 = dma.hbm_to_vmem [thread:$0]  %s17, 64, %s19, [#allocation3]
    $region5: #{tpu_custom_call.1} parent=1 // pred_fallthru
      _
    // Predicated region
    $region6: #{tpu_custom_call.1} parent=1 // pred_check
      _
    $region7: #{tpu_custom_call.1} parent=1 // pred_check_branch
      %23 = sbr.rel (0) target = $region9
    $region8: #{tpu_custom_call.1} parent=1 // pred_region
      %25 = vsyncadd [#allocation6], 0
      %s26 = sshll.u32 %s1, 4
      %s27 = int_to_ptr.hbm [resolvable:$true] %s26
      %s28 = sshll.u32 [#allocation5], 4
      %s29 = int_to_ptr.vmem [resolvable:$true] %s28
      %34 = dma.hbm_to_vmem [thread:$0]  %s27, 8192, %s29, [#allocation6], 128, 128, 8
    $region9: #{tpu_custom_call.1} parent=1 // pred_fallthru
      _
    // Predicated region
    $region10: #{tpu_custom_call.1} parent=1 // pred_check
      _
    $region11: #{tpu_custom_call.1} parent=1 // pred_check_branch
      %36 = sbr.rel (0) target = $region13
    $region12: #{tpu_custom_call.1} parent=1 // pred_region
      _
    $region13: #{tpu_custom_call.1} parent=1 // pred_fallthru
      _
    // Predicated region
    $region14: #{tpu_custom_call.1} parent=1 // pred_check
      _
    $region15: #{tpu_custom_call.1} parent=1 // pred_check_branch
      %38 = sbr.rel (0) target = $region17
    $region16: #{tpu_custom_call.1} parent=1 // pred_region
      %40 = dma.done [#allocation3], 64
    $region17: #{tpu_custom_call.1} parent=1 // pred_fallthru
      _
    // Predicated region
    $region18: #{tpu_custom_call.1} parent=1 // pred_check
      _
    $region19: #{tpu_custom_call.1} parent=1 // pred_check_branch
      %42 = sbr.rel (0) target = $region21
    $region20: #{tpu_custom_call.1} parent=1 // pred_region
      %44 = dma.done [#allocation6], 8192
    $region21: #{tpu_custom_call.1} parent=1 // pred_fallthru
      _
    %v45 = vld [vmem:[#allocation2] sm:$0xf]
    %v46 = vld [vmem:[#allocation5] sm:$0xff]
    %v47 = vld [vmem:[#allocation5 + $0x8] sm:$0xff]
    %v48 = vld [vmem:[#allocation5 + $0x10] sm:$0xff]
    %v49 = vld [vmem:[#allocation5 + $0x18] sm:$0xff]
    %v50 = vld [vmem:[#allocation5 + $0x20] sm:$0xff]
    %v51 = vld [vmem:[#allocation5 + $0x28] sm:$0xff]
    %v52 = vld [vmem:[#allocation5 + $0x30] sm:$0xff]
    %v53 = vld [vmem:[#allocation5 + $0x38] sm:$0xff]
    %v54 = vld [vmem:[#allocation5 + $0x40] sm:$0xff]
    %v55 = vld [vmem:[#allocation5 + $0x48] sm:$0xff]
    %v56 = vld [vmem:[#allocation5 + $0x50] sm:$0xff]
    %v57 = vld [vmem:[#allocation5 + $0x58] sm:$0xff]
    %v58 = vld [vmem:[#allocation5 + $0x60] sm:$0xff]
    %v59 = vld [vmem:[#allocation5 + $0x68] sm:$0xff]
    %v60 = vld [vmem:[#allocation5 + $0x70] sm:$0xff]
    %v61 = vld [vmem:[#allocation5 + $0x78] sm:$0xff]
    %v62 = vld [vmem:[#allocation5 + $0x80] sm:$0xff]
    %v63 = vld [vmem:[#allocation5 + $0x88] sm:$0xff]
    %v64 = vld [vmem:[#allocation5 + $0x90] sm:$0xff]
    %v65 = vld [vmem:[#allocation5 + $0x98] sm:$0xff]
    %v66 = vld [vmem:[#allocation5 + $0xa0] sm:$0xff]
    %v67 = vld [vmem:[#allocation5 + $0xa8] sm:$0xff]
    %v68 = vld [vmem:[#allocation5 + $0xb0] sm:$0xff]
    %v69 = vld [vmem:[#allocation5 + $0xb8] sm:$0xff]
    %v70 = vld [vmem:[#allocation5 + $0xc0] sm:$0xff]
    %v71 = vld [vmem:[#allocation5 + $0xc8] sm:$0xff]
    %v72 = vld [vmem:[#allocation5 + $0xd0] sm:$0xff]
    %v73 = vld [vmem:[#allocation5 + $0xd8] sm:$0xff]
    %v74 = vld [vmem:[#allocation5 + $0xe0] sm:$0xff]
    %v75 = vld [vmem:[#allocation5 + $0xe8] sm:$0xff]
    %v76 = vld [vmem:[#allocation5 + $0xf0] sm:$0xff]
    %v77 = vld [vmem:[#allocation5 + $0xf8] sm:$0xff]
    %v78 = vld [vmem:[#allocation5 + $0x100] sm:$0xff]
    %v79 = vld [vmem:[#allocation5 + $0x108] sm:$0xff]
    %v80 = vld [vmem:[#allocation5 + $0x110] sm:$0xff]
    %v81 = vld [vmem:[#allocation5 + $0x118] sm:$0xff]
    %v82 = vld [vmem:[#allocation5 + $0x120] sm:$0xff]
    %v83 = vld [vmem:[#allocation5 + $0x128] sm:$0xff]
    %v84 = vld [vmem:[#allocation5 + $0x130] sm:$0xff]
    %v85 = vld [vmem:[#allocation5 + $0x138] sm:$0xff]
    %v86 = vld [vmem:[#allocation5 + $0x140] sm:$0xff]
    %v87 = vld [vmem:[#allocation5 + $0x148] sm:$0xff]
    %v88 = vld [vmem:[#allocation5 + $0x150] sm:$0xff]
    %v89 = vld [vmem:[#allocation5 + $0x158] sm:$0xff]
    %v90 = vld [vmem:[#allocation5 + $0x160] sm:$0xff]
    %v91 = vld [vmem:[#allocation5 + $0x168] sm:$0xff]
    %v92 = vld [vmem:[#allocation5 + $0x170] sm:$0xff]
    %v93 = vld [vmem:[#allocation5 + $0x178] sm:$0xff]
    %v94 = vld [vmem:[#allocation5 + $0x180] sm:$0xff]
    %v95 = vld [vmem:[#allocation5 + $0x188] sm:$0xff]
    %v96 = vld [vmem:[#allocation5 + $0x190] sm:$0xff]
    %v97 = vld [vmem:[#allocation5 + $0x198] sm:$0xff]
    %v98 = vld [vmem:[#allocation5 + $0x1a0] sm:$0xff]
    %v99 = vld [vmem:[#allocation5 + $0x1a8] sm:$0xff]
    %v100 = vld [vmem:[#allocation5 + $0x1b0] sm:$0xff]
    %v101 = vld [vmem:[#allocation5 + $0x1b8] sm:$0xff]
    %v102 = vld [vmem:[#allocation5 + $0x1c0] sm:$0xff]
    %v103 = vld [vmem:[#allocation5 + $0x1c8] sm:$0xff]
    %v104 = vld [vmem:[#allocation5 + $0x1d0] sm:$0xff]
    %v105 = vld [vmem:[#allocation5 + $0x1d8] sm:$0xff]
    %v106 = vld [vmem:[#allocation5 + $0x1e0] sm:$0xff]
    %v107 = vld [vmem:[#allocation5 + $0x1e8] sm:$0xff]
    %v108 = vld [vmem:[#allocation5 + $0x1f0] sm:$0xff]
    %v109 = vld [vmem:[#allocation5 + $0x1f8] sm:$0xff]
    %v110 = vld [vmem:[%s2] sm:$0x1]
    %v112 = vperm.slane %v45, 0
    %v113 = vperm.slane %v45, 1
    %v114 = vperm.slane %v45, 2
    %v115 = vperm.slane %v45, 3
    %120 = vmatpush.msra.mxu0 %v61
    %121 = vmatpush.msra.mxu0 %v60
    %122 = vmatpush.msra.mxu0 %v59
    %123 = vmatpush.msra.mxu0 %v58
    %124 = vmatpush.msra.mxu0 %v57
    %125 = vmatpush.msra.mxu0 %v56
    %126 = vmatpush.msra.mxu0 %v55
    %127 = vmatpush.msra.mxu0 %v54
    %128 = vmatpush.msra.mxu0 %v53
    %129 = vmatpush.msra.mxu0 %v52
    %130 = vmatpush.msra.mxu0 %v51
    %131 = vmatpush.msra.mxu0 %v50
    %132 = vmatpush.msra.mxu0 %v49
    %133 = vmatpush.msra.mxu0 %v48
    %134 = vmatpush.msra.mxu0 %v47
    %135 = vmatpush.msra.mxu0 %v46
    %136 = vmatmul.f32.gmra.mxu0 %v112
    %v137 = vpop.f32.mrf.mxu0
    %v138 = vadd.f32 %v110, %v137
    %139 = vdwg.mxu0
    %140 = vmatpush.msra.mxu0 %v77
    %141 = vmatpush.msra.mxu0 %v76
    %142 = vmatpush.msra.mxu0 %v75
    %143 = vmatpush.msra.mxu0 %v74
    %144 = vmatpush.msra.mxu0 %v73
    %145 = vmatpush.msra.mxu0 %v72
    %146 = vmatpush.msra.mxu0 %v71
    %147 = vmatpush.msra.mxu0 %v70
    %148 = vmatpush.msra.mxu0 %v69
    %149 = vmatpush.msra.mxu0 %v68
    %150 = vmatpush.msra.mxu0 %v67
    %151 = vmatpush.msra.mxu0 %v66
    %152 = vmatpush.msra.mxu0 %v65
    %153 = vmatpush.msra.mxu0 %v64
    %154 = vmatpush.msra.mxu0 %v63
    %155 = vmatpush.msra.mxu0 %v62
    %156 = vmatmul.f32.gmra.mxu0 %v113
    %v157 = vpop.f32.mrf.mxu0
    %v158 = vadd.f32 %v138, %v157
    %159 = vdwg.mxu0
    %160 = vmatpush.msra.mxu0 %v93
    %161 = vmatpush.msra.mxu0 %v92
    %162 = vmatpush.msra.mxu0 %v91
    %163 = vmatpush.msra.mxu0 %v90
    %164 = vmatpush.msra.mxu0 %v89
    %165 = vmatpush.msra.mxu0 %v88
    %166 = vmatpush.msra.mxu0 %v87
    %167 = vmatpush.msra.mxu0 %v86
    %168 = vmatpush.msra.mxu0 %v85
    %169 = vmatpush.msra.mxu0 %v84
    %170 = vmatpush.msra.mxu0 %v83
    %171 = vmatpush.msra.mxu0 %v82
    %172 = vmatpush.msra.mxu0 %v81
    %173 = vmatpush.msra.mxu0 %v80
    %174 = vmatpush.msra.mxu0 %v79
    %175 = vmatpush.msra.mxu0 %v78
    %176 = vmatmul.f32.gmra.mxu0 %v114
    %v177 = vpop.f32.mrf.mxu0
    %v178 = vadd.f32 %v158, %v177
    %179 = vdwg.mxu0
    %180 = vmatpush.msra.mxu0 %v109
    %181 = vmatpush.msra.mxu0 %v108
    %182 = vmatpush.msra.mxu0 %v107
    %183 = vmatpush.msra.mxu0 %v106
    %184 = vmatpush.msra.mxu0 %v105
    %185 = vmatpush.msra.mxu0 %v104
    %186 = vmatpush.msra.mxu0 %v103
    %187 = vmatpush.msra.mxu0 %v102
    %188 = vmatpush.msra.mxu0 %v101
    %189 = vmatpush.msra.mxu0 %v100
    %190 = vmatpush.msra.mxu0 %v99
    %191 = vmatpush.msra.mxu0 %v98
    %192 = vmatpush.msra.mxu0 %v97
    %193 = vmatpush.msra.mxu0 %v96
    %194 = vmatpush.msra.mxu0 %v95
    %195 = vmatpush.msra.mxu0 %v94
    %196 = vmatmul.f32.gmra.mxu0 %v115
    %v197 = vpop.f32.mrf.mxu0
    %v198 = vadd.f32 %v178, %v197
    %199 = vdwg.mxu0
    %v200 = vrcp.pop 16.0
    %v201 = vmul.f32 16.0, %v200
    %v202 = vsub.f32 1.0, %v201
    %v203 = vmul.f32 %v200, %v202
    %v204 = vadd.f32 %v200, %v203
    %vm205 = vweird.f32 %v200
    %v206 = vsel %vm205, %v200, %v204
    %v207 = vmul.f32 %v198, %v206
    %v208 = vfloor.f32 %v207
    %v209 = vcvt.f32.s32.to.zero.pseudo %v208
    %210 = vst [vmem:[#allocation7] sm:$0x1] %v209
    // Predicated region
    $region22: #{tpu_custom_call.1} parent=1 // pred_check
      _
    $region23: #{tpu_custom_call.1} parent=1 // pred_check_branch
      %212 = sbr.rel (0) target = $region25
    $region24: #{tpu_custom_call.1} parent=1 // pred_region
      %214 = vsyncadd [#allocation4], 0
      %s216 = sshll.u32 [#allocation7], 4
      %s217 = int_to_ptr.vmem [resolvable:$true] %s216
      %s218 = sshll.u32 %s3, 4
      %s219 = int_to_ptr.hbm [resolvable:$true] %s218
      %221 = dma.vmem_to_hbm [thread:$0]  %s217, 16, %s219, [#allocation4]
    $region25: #{tpu_custom_call.1} parent=1 // pred_fallthru
      _
    // Predicated region
    $region26: #{tpu_custom_call.1} parent=1 // pred_check
      _
    $region27: #{tpu_custom_call.1} parent=1 // pred_check_branch
      %223 = sbr.rel (0) target = $region29
    $region28: #{tpu_custom_call.1} parent=1 // pred_region
      %225 = dma.done [#allocation4], 16
    $region29: #{tpu_custom_call.1} parent=1 // pred_fallthru
      _
    %226 = vsyncpa [#allocation3], 1
    %227 = vsyncpa [#allocation6], 1
    %228 = vsyncpa [#allocation4], 1

</llo_original>
